<compile_context>
chip_gen: v6e
topology: v6e:2x2x1
jax: 0.10.0
libtpu: 0.0.40
codegen_flags: <defaults>
</compile_context>

<pallas_src>
import jax
import jax.numpy as jnp
from jax.experimental import pallas as pl
from jax.experimental.pallas import tpu as pltpu

_ROW_UNIT = 1024          # rows per dense (8,128) f32 tile: 8 sublanes * 128 lanes
_TB_MAX = 262144          # 256K rows -> 12*tb = 3 MiB/step, 6 MiB double-buffered
_TARGET_STEPS = 8         # aim for >=8 grid steps (megacore balance on v7x)
_PALLAS_MIN_BATCH = 1024  # below this, plain jnp beats launch + padding overhead
_VMEM_LIMIT_BYTES = 32 * 1024 * 1024  # explicit budget; >> 24*_TB_MAX, OK on v5e-v7x


def _round_up(x, m):
    return ((x + m - 1) // m) * m


def _pick_tile(batch):
    """Rows per grid step: multiple of 1024, ~batch/8, capped by VMEM budget."""
    tb = _round_up(pl.cdiv(batch, _TARGET_STEPS), _ROW_UNIT)
    return max(_ROW_UNIT, min(_TB_MAX, tb))


def _affine_kernel(params_ref, x_ref, o_ref):
    # params_ref: SMEM f32[3] = [w0, w1, b]   (folded layer_2(layer_1(.)))
    # x_ref:      VMEM f32[2, tb//128, 128]   (features major; batch dense on
    #                                          sublanes x lanes)
    # o_ref:      VMEM f32[tb//128, 128]
    w0 = params_ref[0]
    w1 = params_ref[1]
    b = params_ref[2]
    # Two VPU FMAs per vreg, fully dense tiles, no MXU, no XLU.
    o_ref[...] = x_ref[0] * w0 + x_ref[1] * w1 + b


def circle_model_v0(x, w1, b1, w2, b2):
    """x: [B, 2] float32. Returns [B, 1] float32 logits.

    Same math as torch: layer_2(layer_1(x)) with no activation (weights folded,
    see header note on f32 reassociation)."""
    B = x.shape[0]

    # Exact layer folding:
    #   (x @ w1 + b1) @ w2 + b2 == x @ (w1 @ w2) + (b1 @ w2 + b2)
    w_eff = (w1 @ w2).reshape(2).astype(jnp.float32)          # [2]
    b_eff = (b1 @ w2 + b2).reshape(1).astype(jnp.float32)     # [1]

    if B < _PALLAS_MIN_BATCH:
        # Tiny batch: a single fused XLA elementwise op; no padding, no launch.
        return x.astype(jnp.float32) @ w_eff[:, None] + b_eff

    params = jnp.concatenate([w_eff, b_eff])                  # [3] -> SMEM

    tb = _pick_tile(B)
    b_pad = _round_up(B, tb)
    n_rows = b_pad // 128        # sublane-dense row count
    tb_rows = tb // 128          # multiple of 8 by construction

    # Feature-major, lane+sublane dense layout: [2, b_pad//128, 128].
    # TODO(synk): produce x feature-major ([2, B]) upstream / fuse into the
    # producer; this transpose+pad is a separate XLA pass (~16 B/row) on top of
    # the kernel's 12 B/row and is the remaining end-to-end cost.
    x_t = jnp.pad(x.astype(jnp.float32).T, ((0, 0), (0, b_pad - B)))
    x_3d = x_t.reshape(2, n_rows, 128)

    out = pl.pallas_call(
        _affine_kernel,
        out_shape=jax.ShapeDtypeStruct((n_rows, 128), jnp.float32),
        grid=(b_pad // tb,),
        in_specs=[
            pl.BlockSpec(memory_space=pltpu.MemorySpace.SMEM),        # params
            pl.BlockSpec((2, tb_rows, 128), lambda i: (0, i, 0)),     # x tile
        ],
        out_specs=pl.BlockSpec((tb_rows, 128), lambda i: (i, 0)),
        compiler_params=pltpu.CompilerParams(
            dimension_semantics=("parallel",),     # shard batch across TCs (v7x)
            vmem_limit_bytes=_VMEM_LIMIT_BYTES,
        ),
        cost_estimate=pl.CostEstimate(
            flops=4 * B, transcendentals=0, bytes_accessed=12 * B),
    )(params, x_3d)

    # Back to the PyTorch-facing [B, 1] layout; drop the padding.
    return out.reshape(b_pad)[:B].reshape(B, 1)


def init_params(key):
    """Deterministic init mimicking nn.Linear's uniform(-1/sqrt(fan_in), ...)."""
    k1, k2, k3, k4 = jax.random.split(key, 4)
    # layer_1: in=2, out=5  -> stored transposed as [2, 5]
    lim1 = 1.0 / jnp.sqrt(2.0)
    w1 = jax.random.uniform(k1, (2, 5), jnp.float32, -lim1, lim1)
    b1 = jax.random.uniform(k2, (1, 5), jnp.float32, -lim1, lim1)
    # layer_2: in=5, out=1  -> stored transposed as [5, 1]
    lim2 = 1.0 / jnp.sqrt(5.0)
    w2 = jax.random.uniform(k3, (5, 1), jnp.float32, -lim2, lim2)
    b2 = jax.random.uniform(k4, (1, 1), jnp.float32, -lim2, lim2)
    return w1, b1, w2, b2


if __name__ == "__main__":
    key = jax.random.PRNGKey(0)
    kx, kp = jax.random.split(key)
    w1, b1, w2, b2 = init_params(kp)

    # Pallas path: batch large enough for a multi-step grid (here 5 steps of
    # 1024 rows after padding 4100 -> 5120), non-multiple of the tile to
    # exercise the padding logic.
    B = 4100
    x = jax.random.normal(kx, (B, 2), jnp.float32)
    out = circle_model_v0(x, w1, b1, w2, b2)
    jax.block_until_ready(out)
    ref = (x @ w1 + b1) @ w2 + b2
    assert out.shape == (B, 1)
    assert jnp.allclose(out, ref, atol=1e-5), "pallas path mismatch vs reference"

    # Small-batch fallback path (plain jnp; no kernel launch).
    xs = jax.random.normal(kx, (8, 2), jnp.float32)
    outs = circle_model_v0(xs, w1, b1, w2, b2)
    jax.block_until_ready(outs)
    refs = (xs @ w1 + b1) @ w2 + b2
    assert outs.shape == (8, 1)
    assert jnp.allclose(outs, refs, atol=1e-5), "fallback path mismatch vs reference"

    print("KERNEL_OK")
</pallas_src>

<mosaic_0001>
module attributes {stable_mosaic.version = 11 : i64} {
  func.func @_affine_kernel(%arg0: i32, %arg1: memref<3xf32, #tpu.memory_space<smem>>, %arg2: memref<2x8x128xf32, #tpu.memory_space<vmem>>, %arg3: memref<8x128xf32, #tpu.memory_space<vmem>>) attributes {dimension_semantics = [#tpu.dimension_semantics<parallel>], iteration_bounds = array<i64: 5>, scalar_prefetch = 0 : i64, scratch_operands = 0 : i64, tpu.core_type = #tpu.core_type<tc>, window_params = [{transform_indices = @transform_0, window_bounds = array<i64: 3>}, {transform_indices = @transform_1, window_bounds = array<i64: 2, 8, 128>}, {transform_indices = @transform_2, window_bounds = array<i64: 8, 128>}]} {
    %c0 = arith.constant 0 : index
    %0 = memref.load %arg1[%c0] : memref<3xf32, #tpu.memory_space<smem>>
    %c1 = arith.constant 1 : index
    %1 = memref.load %arg1[%c1] : memref<3xf32, #tpu.memory_space<smem>>
    %c2 = arith.constant 2 : index
    %2 = memref.load %arg1[%c2] : memref<3xf32, #tpu.memory_space<smem>>
    %c0_0 = arith.constant 0 : index
    %c0_1 = arith.constant 0 : index
    %c0_2 = arith.constant 0 : index
    %3 = vector.load %arg2[%c0_0, %c0_1, %c0_2] : memref<2x8x128xf32, #tpu.memory_space<vmem>>, vector<1x8x128xf32>
    %4 = vector.shape_cast %3 : vector<1x8x128xf32> to vector<8x128xf32>
    %5 = vector.broadcast %0 : f32 to vector<8x128xf32>
    %6 = arith.mulf %4, %5 : vector<8x128xf32>
    %c1_3 = arith.constant 1 : index
    %c0_4 = arith.constant 0 : index
    %c0_5 = arith.constant 0 : index
    %7 = vector.load %arg2[%c1_3, %c0_4, %c0_5] : memref<2x8x128xf32, #tpu.memory_space<vmem>>, vector<1x8x128xf32>
    %8 = vector.shape_cast %7 : vector<1x8x128xf32> to vector<8x128xf32>
    %9 = vector.broadcast %1 : f32 to vector<8x128xf32>
    %10 = arith.mulf %8, %9 : vector<8x128xf32>
    %11 = arith.addf %6, %10 : vector<8x128xf32>
    %12 = vector.broadcast %2 : f32 to vector<8x128xf32>
    %13 = arith.addf %11, %12 : vector<8x128xf32>
    %c0_6 = arith.constant 0 : index
    %c0_7 = arith.constant 0 : index
    %14 = vector.load %arg3[%c0_6, %c0_7] : memref<8x128xf32, #tpu.memory_space<vmem>>, vector<8x128xf32>
    tpu.vector_store %arg3[%c0_6, %c0_7], %13 {strides = array<i32>} : memref<8x128xf32, #tpu.memory_space<vmem>>, vector<8x128xf32>,
    return
  }
  func.func @transform_0(%arg0: i32) -> i32 {
    %c0_i32 = arith.constant 0 : i32
    %c0_i32_0 = arith.constant 0 : i32
    return %c0_i32 : i32
  }
  func.func @transform_1(%arg0: i32) -> (i32, i32, i32) {
    %c0_i32 = arith.constant 0 : i32
    %c0_i32_0 = arith.constant 0 : i32
    %c0_i32_1 = arith.constant 0 : i32
    return %c0_i32, %arg0, %c0_i32_0 : i32, i32, i32
  }
  func.func @transform_2(%arg0: i32) -> (i32, i32) {
    %c0_i32 = arith.constant 0 : i32
    %c0_i32_0 = arith.constant 0 : i32
    return %arg0, %c0_i32 : i32, i32
  }
}

</mosaic_0001>

<llo_original>
// kernel: tpu_custom_call.1
$region0: #{tpu_custom_call.1}
  #allocation0 [shape = 'u32[]', space=smem, size = 0x4, offset = 0x4, fixed_abs, tag = 'smem constant byte address 0x4 - core index']
  #allocation1 [shape = 'u32[144,128]{1,0:T(1,128)}', space=vmem, size = 0x12000, scoped, tag = 'internal scratch']
  %s0 = inlined_call_operand.hbm [shape: f32[3], index: 0, kind: input, shape index: {}]
  %s1 = inlined_call_operand.hbm [shape: f32[2,40,128], index: 1, kind: input, shape index: {}]
  %s2 = inlined_call_operand.hbm [shape: f32[40,128], index: 2, kind: output, shape index: {}]
  %s3 = sld [smem:[#allocation0]]
  $region49: #{tpu_custom_call.1} parent=0
    _
  %s5 = ssub.s32 1, %s3
  %s6 = scalar_select 0, %s5, %s3
  $region1: #{tpu_custom_call.1} parent=0
    #allocation2 [shape = 'u8[512]{0}', space=smem, size = 0x200, scoped, tag = 'input window, operand 0, single buffered']
    #allocation3 [shape = 's32[2]{0}', space=sflag, size = 0x8, scoped, tag = 'scoped memory for tpu_custom_call.1']
    #allocation4 [shape = 's32[2]{0}', space=sflag, size = 0x8, scoped, tag = 'scoped memory for tpu_custom_call.1']
    #allocation5 [shape = 's32[2]{0}', space=sflag, size = 0x8, scoped, tag = 'scoped memory for tpu_custom_call.1']
    #allocation6 [shape = 'u8[16384]{0}', space=vmem, size = 0x4000, scoped, tag = 'input window, operand 1']
    #allocation7 [shape = 'u8[8192]{0}', space=vmem, size = 0x2000, scoped, tag = 'output window, operand 0']
    %7 = vsyncpa [#allocation5], 0
    %8 = vsyncpa [#allocation3], 0
    %s9 = scalar_lea.sflag [#allocation3], 1
    %10 = vsyncpa %s9, 0
    %11 = vsyncpa [#allocation4], 0
    %s12 = scalar_lea.sflag [#allocation4], 1
    %13 = vsyncpa %s12, 0
    loop: start=0, step=1, limit=7
    $region2: #{tpu_custom_call.1} parent=1 // loop_pre_header
      _
    $region3: #{tpu_custom_call.1} parent=1 // loop_header
      %s15 = sphi 0, %s19
      %p16 = scmp.ge.s32.totalorder %s15, 7
      %s23 = sphi 0, %s23
      %s25 = sphi 0, %s23
      %s26 = sphi 0, %s25
      %s40 = sphi 0, %s26
      %s46 = sphi 0, %s48
      %s49 = sphi 0, %s46
      %s50 = sphi 0, %s49
      %s66 = sphi 0, %s50
      %s72 = sphi 0, %s74
      %s75 = sphi 0, %s72
      %s76 = sphi 0, %s75
      %s92 = sphi 0, %s76
    $region4: #{tpu_custom_call.1} parent=1 // loop_header_branch
      %18 = sbr.rel (%p16) target = $region8
    $region5: #{tpu_custom_call.1} parent=1 // loop_body
      %s20 = ssub.s32 %s15, 1
      %s21 = ssub.s32 %s15, 2
      %s22 = sadd.s32 %s15, 1
      %s24 = sadd.s32 %s23, 1
      %p27 = scmp.eq.s32.totalorder %s15, 4
      %p28 = scmp.ne.s32.totalorder %s23, %s25
      %p29 = scmp.eq.s32.totalorder %s15, 0
      %p30 = por %p28, %p29
      %p31 = scmp.ne.s32.totalorder %s23, %s25
      %p32 = scmp.eq.s32.totalorder %s20, 4
      %p33 = por %p31, %p32
      %p34 = scmp.ne.s32.totalorder %s25, %s26
      %p35 = scmp.eq.s32.totalorder %s20, 0
      %p36 = por %p34, %p35
      %p37 = scmp.ne.s32.totalorder %s25, %s26
      %p38 = scmp.eq.s32.totalorder %s21, 4
      %p39 = por %p37, %p38
      %p41 = scmp.ne.s32.totalorder %s26, %s40
      %p42 = scmp.eq.s32.totalorder %s21, 0
      %p43 = por %p41, %p42
      %s44 = ssub.s32 %s15, %s22
      %p45 = scmp.eq.s32.totalorder %s44, 0
      %s47 = sadd.s32 %s46, 1
      %s48 = scalar_select %p45, %s46, %s47
      %p51 = pneg %p45
      %p52 = scmp.eq.s32.totalorder %s15, 4
      %p53 = por %p51, %p52
      %p54 = scmp.ne.s32.totalorder %s46, %s49
      %p55 = scmp.eq.s32.totalorder %s15, 0
      %p56 = por %p54, %p55
      %p57 = scmp.ne.s32.totalorder %s46, %s49
      %p58 = scmp.eq.s32.totalorder %s20, 4
      %p59 = por %p57, %p58
      %p60 = scmp.ne.s32.totalorder %s49, %s50
      %p61 = scmp.eq.s32.totalorder %s20, 0
      %p62 = por %p60, %p61
      %p63 = scmp.ne.s32.totalorder %s49, %s50
      %p64 = scmp.eq.s32.totalorder %s21, 4
      %p65 = por %p63, %p64
      %p67 = scmp.ne.s32.totalorder %s50, %s66
      %p68 = scmp.eq.s32.totalorder %s21, 0
      %p69 = por %p67, %p68
      %s70 = ssub.s32 %s15, %s22
      %p71 = scmp.eq.s32.totalorder %s70, 0
      %s73 = sadd.s32 %s72, 1
      %s74 = scalar_select %p71, %s72, %s73
      %p77 = pneg %p71
      %p78 = scmp.eq.s32.totalorder %s15, 4
      %p79 = por %p77, %p78
      %p80 = scmp.ne.s32.totalorder %s72, %s75
      %p81 = scmp.eq.s32.totalorder %s15, 0
      %p82 = por %p80, %p81
      %p83 = scmp.ne.s32.totalorder %s72, %s75
      %p84 = scmp.eq.s32.totalorder %s20, 4
      %p85 = por %p83, %p84
      %p86 = scmp.ne.s32.totalorder %s75, %s76
      %p87 = scmp.eq.s32.totalorder %s20, 0
      %p88 = por %p86, %p87
      %p89 = scmp.ne.s32.totalorder %s75, %s76
      %p90 = scmp.eq.s32.totalorder %s21, 4
      %p91 = por %p89, %p90
      %p93 = scmp.ne.s32.totalorder %s76, %s92
      %p94 = scmp.eq.s32.totalorder %s21, 0
      %p95 = por %p93, %p94
      %p96 = scmp.le.s32.totalorder 1, %s15
      %p97 = scmp.lt.s32.totalorder %s15, 6
      %p98 = pnand %p96, %p97
      %p99 = pneg %p98
      // Predicated region
      $region9: #{tpu_custom_call.1} parent=5 // pred_check
        _
      $region10: #{tpu_custom_call.1} parent=5 // pred_check_branch
        %101 = sbr.rel (%p98) target = $region12
      $region11: #{tpu_custom_call.1} parent=5 // pred_region
        %s102 = ssub.s32 %s15, 1
        // Predicated region
        $region13: #{tpu_custom_call.1} parent=11 // pred_check
          %p103 = pneg %p36
        $region14: #{tpu_custom_call.1} parent=11 // pred_check_branch
          %105 = sbr.rel (%p103) target = $region16
        $region15: #{tpu_custom_call.1} parent=11 // pred_region
          %s107 = ssub.s32 16, 16
          %108 = vsyncadd [#allocation5], %s107
          %111 = dma.hbm_to_smem %s0, 16, [#allocation2], [#allocation5]
        $region16: #{tpu_custom_call.1} parent=11 // pred_fallthru
          _
      $region12: #{tpu_custom_call.1} parent=5 // pred_fallthru
        _
      %p112 = scmp.lt.s32.totalorder %s15, 5
      // Predicated region
      $region17: #{tpu_custom_call.1} parent=5 // pred_check
        %p113 = pneg %p112
      $region18: #{tpu_custom_call.1} parent=5 // pred_check_branch
        %115 = sbr.rel (%p113) target = $region20
      $region19: #{tpu_custom_call.1} parent=5 // pred_region
        // Predicated region
        $region21: #{tpu_custom_call.1} parent=19 // pred_check
          %p116 = pneg %p56
        $region22: #{tpu_custom_call.1} parent=19 // pred_check_branch
          %118 = sbr.rel (%p116) target = $region24
        $region23: #{tpu_custom_call.1} parent=19 // pred_region
          %s119 = sand.u32 %s46, 1
          %s120 = scalar_lea.sflag [#allocation3], %s119
          %s121 = sand.u32 %s46, 1
          %s122 = smul.addr %s121, 16
          %s123 = scalar_lea.vmem [#allocation6], %s122
          %s125 = ssub.s32 256, 256
          %126 = vsyncadd %s120, %s125
          %s127 = smul.addr %s15, 128
          %s128 = scalar_lea.hbm %s1, %s127
          %s129 = sshll.u32 %s123, 4
          %s130 = int_to_ptr.vmem [resolvable:$true] %s129
          %135 = dma.hbm_to_vmem [thread:$0]  %s128, 256, %s130, %s120, 640, 128, 8
        $region24: #{tpu_custom_call.1} parent=19 // pred_fallthru
          _
      $region20: #{tpu_custom_call.1} parent=5 // pred_fallthru
        _
      %p136 = scmp.le.s32.totalorder 1, %s15
      %p137 = scmp.lt.s32.totalorder %s15, 6
      %p138 = pnand %p136, %p137
      %p139 = pneg %p138
      // Predicated region
      $region25: #{tpu_custom_call.1} parent=5 // pred_check
        _
      $region26: #{tpu_custom_call.1} parent=5 // pred_check_branch
        %141 = sbr.rel (%p138) target = $region28
      $region27: #{tpu_custom_call.1} parent=5 // pred_region
        %s142 = ssub.s32 %s15, 1
        // Predicated region
        $region29: #{tpu_custom_call.1} parent=27 // pred_check
          %p143 = pneg %p36
        $region30: #{tpu_custom_call.1} parent=27 // pred_check_branch
          %145 = sbr.rel (%p143) target = $region32
        $region31: #{tpu_custom_call.1} parent=27 // pred_region
          %146 = dma.done [#allocation5], 16
        $region32: #{tpu_custom_call.1} parent=27 // pred_fallthru
          _
        %s147 = sand.u32 %s49, 1
        %s148 = scalar_lea.sflag [#allocation3], %s147
        %s149 = sand.u32 %s49, 1
        %s150 = smul.addr %s149, 16
        %s151 = scalar_lea.vmem [#allocation6], %s150
        // Predicated region
        $region33: #{tpu_custom_call.1} parent=27 // pred_check
          %p152 = pneg %p62
        $region34: #{tpu_custom_call.1} parent=27 // pred_check_branch
          %154 = sbr.rel (%p152) target = $region36
        $region35: #{tpu_custom_call.1} parent=27 // pred_region
          %155 = dma.done %s148, 256
        $region36: #{tpu_custom_call.1} parent=27 // pred_fallthru
          _
        %156 = sfence
        %p157 = pneg %p36
        %p158 = pneg %p33
        %s159 = sand.u32 %s49, 1
        %s160 = scalar_lea.sflag [#allocation3], %s159
        %s161 = sand.u32 %s49, 1
        %s162 = smul.addr %s161, 16
        %s163 = scalar_lea.vmem [#allocation6], %s162
        %p164 = pneg %p62
        %p165 = pneg %p59
        %p166 = pneg %p88
        %p167 = pneg %p85
        %s168 = sand.u32 %s75, 1
        %s169 = scalar_lea.sflag [#allocation4], %s168
        %s170 = sand.u32 %s75, 1
        %s171 = smul.addr %s170, 8
        %s172 = scalar_lea.vmem [#allocation7], %s171
        %s173 = sld [smem:[#allocation2]]
        %s174 = sld [smem:[#allocation2 + $0x1]]
        %s175 = sld [smem:[#allocation2 + $0x2]]
        %v176 = vld [vmem:[%s151] sm:$0xff]
        %v177 = vstv %s173
        %v178 = vmul.f32 %v176, %v177
        %s179 = scalar_lea.vmem %s151, 8 [#allocation6]
        %v180 = vld [vmem:[%s179] sm:$0xff]
        %v181 = vstv %s174
        %v182 = vmul.f32 %v180, %v181
        %v183 = vadd.f32 %v178, %v182
        %v184 = vstv %s175
        %v185 = vadd.f32 %v183, %v184
        %186 = vst [vmem:[%s172] sm:$0xff] %v185
        %s187 = sand.u32 %s75, 1
        %s188 = scalar_lea.sflag [#allocation4], %s187
        %s189 = sand.u32 %s75, 1
        %s190 = smul.addr %s189, 8
        %s191 = scalar_lea.vmem [#allocation7], %s190
        // Predicated region
        $region37: #{tpu_custom_call.1} parent=27 // pred_check
          %p192 = pneg %p85
        $region38: #{tpu_custom_call.1} parent=27 // pred_check_branch
          %194 = sbr.rel (%p192) target = $region40
        $region39: #{tpu_custom_call.1} parent=27 // pred_region
          %s196 = ssub.s32 128, 128
          %197 = vsyncadd %s188, %s196
          %s198 = smul.addr %s20, 128
          %s199 = scalar_lea.hbm %s2, %s198
          %s201 = sshll.u32 %s191, 4
          %s202 = int_to_ptr.vmem [resolvable:$true] %s201
          %204 = dma.vmem_to_hbm [thread:$0]  %s202, 128, %s199, %s188
        $region40: #{tpu_custom_call.1} parent=27 // pred_fallthru
          _
      $region28: #{tpu_custom_call.1} parent=5 // pred_fallthru
        _
      %p205 = scmp.le.s32.totalorder 2, %s15
      // Predicated region
      $region41: #{tpu_custom_call.1} parent=5 // pred_check
        %p206 = pneg %p205
      $region42: #{tpu_custom_call.1} parent=5 // pred_check_branch
        %208 = sbr.rel (%p206) target = $region44
      $region43: #{tpu_custom_call.1} parent=5 // pred_region
        %s209 = ssub.s32 %s15, 2
        // Predicated region
        $region45: #{tpu_custom_call.1} parent=43 // pred_check
          %p210 = pneg %p91
        $region46: #{tpu_custom_call.1} parent=43 // pred_check_branch
          %212 = sbr.rel (%p210) target = $region48
        $region47: #{tpu_custom_call.1} parent=43 // pred_region
          %s213 = sand.u32 %s76, 1
          %s214 = scalar_lea.sflag [#allocation4], %s213
          %s215 = sand.u32 %s76, 1
          %s216 = smul.addr %s215, 8
          %s217 = scalar_lea.vmem [#allocation7], %s216
          %218 = dma.done %s214, 128
        $region48: #{tpu_custom_call.1} parent=43 // pred_fallthru
          _
      $region44: #{tpu_custom_call.1} parent=5 // pred_fallthru
        _
    $region6: #{tpu_custom_call.1} parent=1 // loop_footer
      %s19 = sadd.s32 1, %s15
    $region7: #{tpu_custom_call.1} parent=1 // loop_footer_branch
      %14 = sbr.rel target = $region3
    $region8: #{tpu_custom_call.1} parent=1 // loop_exit
      _
    %219 = vsyncpa [#allocation3], 1
    %s220 = scalar_lea.sflag [#allocation3], 1
    %221 = vsyncpa %s220, 1
    %222 = vsyncpa [#allocation4], 1
    %s223 = scalar_lea.sflag [#allocation4], 1
    %224 = vsyncpa %s223, 1
    %225 = vsyncpa [#allocation5], 1
    %s226 = scalar_lea.sflag [#allocation5], 1
    %227 = vsyncpa %s226, 1

</llo_original>
